<compile_context>
chip_gen: v6e
topology: v6e:2x2x1
jax: 0.10.0
libtpu: 0.0.40
codegen_flags: <defaults>
</compile_context>

<pallas_src>
import functools

import jax
import jax.numpy as jnp
from jax.experimental import pallas as pl
from jax.experimental.pallas import tpu as pltpu


def _rsum(x):
    # (Bt, Ht, W) -> (Bt, 1, 1).  Reduce the large sublane axis (H) first —
    # that lowers to mostly plain VPU vreg adds — then lane-reduce only the
    # small (Bt, 1, W) remainder, so XLU work per statistic stays negligible.
    return jnp.sum(jnp.sum(x, axis=1, keepdims=True), axis=2, keepdims=True)


def ssi_loss_kernel(p_ref, t_ref, m_ref, out_ref,
                    a00_ref, a01_ref, a11_ref, b0_ref, b1_ref,
                    scale_ref, shift_ref, num_ref,
                    *, batch, height, bt, ht):
    s = pl.program_id(1)                 # 0: normal-equation stats, 1: |err|
    h = pl.program_id(2)                 # H-tile index
    last_h = pl.num_programs(2) - 1

    # ---- effective bool mask for this tile (select-based, no float mask) ----
    m = m_ref[...]
    if m.dtype != jnp.bool_:
        m = m != 0
    if batch % bt != 0:                  # tail batch block: kill padded rows
        bi = jax.lax.broadcasted_iota(jnp.int32, (bt, 1, 1), 0)
        m = jnp.logical_and(m, (pl.program_id(0) * bt + bi) < batch)
    if height % ht != 0:                 # tail H tile: kill padded rows
        hi = jax.lax.broadcasted_iota(jnp.int32, (1, ht, 1), 1)
        m = jnp.logical_and(m, (h * ht + hi) < height)

    # In-register upcast: HBM traffic stays at the input dtype width.
    p = p_ref[...].astype(jnp.float32)
    t = t_ref[...].astype(jnp.float32)

    # ------------------------------- pass 0 -------------------------------
    @pl.when(jnp.logical_and(s == 0, h == 0))
    def _():
        a00_ref[...] = jnp.zeros_like(a00_ref)
        a01_ref[...] = jnp.zeros_like(a01_ref)
        a11_ref[...] = jnp.zeros_like(a11_ref)
        b0_ref[...] = jnp.zeros_like(b0_ref)
        b1_ref[...] = jnp.zeros_like(b1_ref)

    @pl.when(s == 0)
    def _():
        zero = jnp.float32(0.0)
        pm = jnp.where(m, p, zero)       # masked values (and kills OOB junk)
        tm = jnp.where(m, t, zero)
        a00_ref[...] += _rsum(pm * pm)
        a01_ref[...] += _rsum(pm)
        a11_ref[...] += _rsum(jnp.where(m, jnp.float32(1.0), zero))
        b0_ref[...] += _rsum(pm * tm)
        b1_ref[...] += _rsum(tm)

    # ------------------------------- pass 1 -------------------------------
    @pl.when(jnp.logical_and(s == 1, h == 0))
    def _():
        a00 = a00_ref[...]
        a01 = a01_ref[...]
        a11 = a11_ref[...]
        b0 = b0_ref[...]
        b1 = b1_ref[...]
        det = a00 * a11 - a01 * a01
        valid = det > 0.0                          # matches the torch module
        safe_det = jnp.where(valid, det, jnp.float32(1.0))
        scale_ref[...] = jnp.where(valid, (a11 * b0 - a01 * b1) / safe_det, 0.0)
        shift_ref[...] = jnp.where(valid, (-a01 * b0 + a00 * b1) / safe_det, 0.0)
        num_ref[...] = jnp.zeros_like(num_ref)

    @pl.when(s == 1)
    def _():
        err = jnp.abs(scale_ref[...] * p + shift_ref[...] - t)
        num_ref[...] += _rsum(jnp.where(m, err, jnp.float32(0.0)))

    @pl.when(jnp.logical_and(s == 1, h == last_h))
    def _():
        out_ref[:, :, 0:1] = num_ref[...]          # sum of masked |err|
        out_ref[:, :, 1:2] = a11_ref[...]          # number of masked pixels


def _physical_vmem_bytes():
    try:
        return int(pltpu.get_tpu_info().vmem_capacity_bytes)
    except Exception:
        return 64 << 20        # conservative default (v7x per-TensorCore VMEM)


def ssi_loss(prediction, target, mask):
    """prediction/target: (B,1,H,W); mask: (B,1,H,W) or (B,H,W), bool/numeric."""
    if mask.ndim == 4:
        mask = jnp.squeeze(mask, axis=1)
    prediction = jnp.squeeze(prediction, axis=1)
    target = jnp.squeeze(target, axis=1)

    B, H, W = prediction.shape
    assert target.shape == (B, H, W) and mask.shape == (B, H, W)

    in_bpe = (prediction.dtype.itemsize + target.dtype.itemsize
              + mask.dtype.itemsize)

    # ~2 MiB of raw input per grid step (review: 2-4 MiB): big enough to
    # amortize the ~0.35us/step overhead, small enough that double-buffered
    # inputs + in-kernel f32 temporaries stay far below v7x's 64 MiB VMEM.
    target_tile_bytes = 2 << 20
    bytes_per_row = W * in_bpe
    max_rows = max(1, target_tile_bytes // bytes_per_row)

    if H <= max_rows:
        # Whole image(s) per block; group small images per step but keep the
        # batch ("parallel") axis at >= min(B, 4) blocks so v7x megacore
        # sharding and the DMA pipeline both have steps to schedule.
        Ht = H
        bt_vmem = max(1, max_rows // H)
        bt_grid = pl.cdiv(B, min(B, 4))
        Bt = max(1, min(B, bt_vmem, bt_grid))
    else:
        # Huge image: H-tile in multiples of 8 rows (keeps the (8,128) layout
        # rule); the two-pass grid accumulates stats across H tiles.
        Bt = 1
        Ht = min(H, max(8, (max_rows // 8) * 8))

    nb = pl.cdiv(B, Bt)
    nh = pl.cdiv(H, Ht)
    grid = (nb, 2, nh)

    # VMEM budget: double-buffered input tiles + allowance for the in-kernel
    # f32 temporaries (upcasts / selects / products / |err|), capped at 75% of
    # physical VMEM so we never request the whole of v7x's 64 MiB.
    elems = Bt * Ht * W
    vmem_est = 2 * elems * in_bpe + 28 * elems + (4 << 20)
    vmem_cap = (_physical_vmem_bytes() * 3) // 4
    vmem_limit = int(min(max(vmem_est, 32 << 20), vmem_cap))

    in_spec = pl.BlockSpec((Bt, Ht, W), lambda b, s, h: (b, h, 0))
    kernel = functools.partial(ssi_loss_kernel, batch=B, height=H, bt=Bt, ht=Ht)

    out = pl.pallas_call(
        kernel,
        out_shape=jax.ShapeDtypeStruct((B, 1, 2), jnp.float32),
        grid_spec=pltpu.PrefetchScalarGridSpec(
            num_scalar_prefetch=0,
            grid=grid,
            in_specs=[in_spec, in_spec, in_spec],
            out_specs=pl.BlockSpec((Bt, 1, 2), lambda b, s, h: (b, 0, 0)),
            scratch_shapes=[pltpu.VMEM((Bt, 1, 1), jnp.float32)
                            for _ in range(8)],
        ),
        compiler_params=pltpu.CompilerParams(
            dimension_semantics=("parallel", "arbitrary", "arbitrary"),
            vmem_limit_bytes=vmem_limit,
        ),
    )(prediction, target, mask)

    num = out[:, 0, 0]       # per-image sum of masked |scale*p + shift - t|
    den = out[:, 0, 1]       # per-image count of masked pixels
    # l1_loss(scaled_prediction[mask], target[mask]) over the whole batch.
    return jnp.sum(num) / jnp.sum(den)


def ssi_loss_ref(prediction, target, mask):
    """Pure-JAX reference mirroring the PyTorch forward."""
    if mask.ndim == 4:
        mask = mask[:, 0]
    p = prediction[:, 0].astype(jnp.float32)
    t = target[:, 0].astype(jnp.float32)
    m = mask.astype(jnp.float32)
    a_00 = jnp.sum(m * p * p, (1, 2))
    a_01 = jnp.sum(m * p, (1, 2))
    a_11 = jnp.sum(m, (1, 2))
    b_0 = jnp.sum(m * p * t, (1, 2))
    b_1 = jnp.sum(m * t, (1, 2))
    det = a_00 * a_11 - a_01 * a_01
    valid = det > 0
    sd = jnp.where(valid, det, 1.0)
    scale = jnp.where(valid, (a_11 * b_0 - a_01 * b_1) / sd, 0.0)
    shift = jnp.where(valid, (-a_01 * b_0 + a_00 * b_1) / sd, 0.0)
    sp = scale[:, None, None] * p + shift[:, None, None]
    return jnp.sum(jnp.abs(sp - t) * m) / jnp.sum(m)


if __name__ == "__main__":
    key = jax.random.PRNGKey(0)
    k1, k2, k3 = jax.random.split(key, 3)

    B, H, W = 2, 16, 16
    prediction = jax.random.normal(k1, (B, 1, H, W), dtype=jnp.float32)
    target = 0.5 * jax.random.normal(k2, (B, 1, H, W), dtype=jnp.float32) + 2.0
    mask = jax.random.uniform(k3, (B, 1, H, W)) > 0.3   # bool mask, 1 B/elem

    loss = ssi_loss(prediction, target, mask)
    jax.block_until_ready(loss)

    ref = ssi_loss_ref(prediction, target, mask)
    assert jnp.allclose(loss, ref, rtol=1e-5, atol=1e-5), (loss, ref)

    print("KERNEL_OK")
</pallas_src>

<mosaic_0001>
module attributes {stable_mosaic.version = 11 : i64} {
  func.func @ssi_loss_kernel(%arg0: i32, %arg1: i32, %arg2: i32, %arg3: memref<1x16x16xf32, #tpu.memory_space<vmem>>, %arg4: memref<1x16x16xf32, #tpu.memory_space<vmem>>, %arg5: memref<1x16x16xi32, #tpu.memory_space<vmem>>, %arg6: memref<1x1x2xf32, #tpu.memory_space<vmem>>, %arg7: memref<1x1x1xf32, #tpu.memory_space<vmem>>, %arg8: memref<1x1x1xf32, #tpu.memory_space<vmem>>, %arg9: memref<1x1x1xf32, #tpu.memory_space<vmem>>, %arg10: memref<1x1x1xf32, #tpu.memory_space<vmem>>, %arg11: memref<1x1x1xf32, #tpu.memory_space<vmem>>, %arg12: memref<1x1x1xf32, #tpu.memory_space<vmem>>, %arg13: memref<1x1x1xf32, #tpu.memory_space<vmem>>, %arg14: memref<1x1x1xf32, #tpu.memory_space<vmem>>) attributes {dimension_semantics = [#tpu.dimension_semantics<parallel>, #tpu.dimension_semantics<arbitrary>, #tpu.dimension_semantics<arbitrary>], iteration_bounds = array<i64: 2, 2, 1>, scalar_prefetch = 0 : i64, scratch_operands = 8 : i64, tpu.core_type = #tpu.core_type<tc>, window_params = [{transform_indices = @transform_0, window_bounds = array<i64: 1, 16, 16>}, {transform_indices = @transform_1, window_bounds = array<i64: 1, 16, 16>}, {transform_indices = @transform_2, window_bounds = array<i64: 1, 16, 16>}, {transform_indices = @transform_3, window_bounds = array<i64: 1, 1, 2>}]} {
    %c0 = arith.constant 0 : index
    %c0_0 = arith.constant 0 : index
    %c0_1 = arith.constant 0 : index
    %0 = vector.load %arg5[%c0, %c0_0, %c0_1] : memref<1x16x16xi32, #tpu.memory_space<vmem>>, vector<1x16x16xi32>
    %cst = arith.constant dense<0> : vector<1x16x16xi32>
    %1 = arith.cmpi ne, %0, %cst : vector<1x16x16xi32>
    %c0_2 = arith.constant 0 : index
    %c0_3 = arith.constant 0 : index
    %c0_4 = arith.constant 0 : index
    %2 = vector.load %arg3[%c0_2, %c0_3, %c0_4] : memref<1x16x16xf32, #tpu.memory_space<vmem>>, vector<1x16x16xf32>
    %c0_5 = arith.constant 0 : index
    %c0_6 = arith.constant 0 : index
    %c0_7 = arith.constant 0 : index
    %3 = vector.load %arg4[%c0_5, %c0_6, %c0_7] : memref<1x16x16xf32, #tpu.memory_space<vmem>>, vector<1x16x16xf32>
    %c0_i32 = arith.constant 0 : i32
    %4 = arith.cmpi eq, %arg1, %c0_i32 : i32
    %c0_i32_8 = arith.constant 0 : i32
    %5 = arith.cmpi eq, %arg2, %c0_i32_8 : i32
    %6 = arith.andi %4, %5 : i1
    %7 = arith.extui %6 : i1 to i32
    %c0_i32_9 = arith.constant 0 : i32
    %8 = arith.cmpi ne, %7, %c0_i32_9 : i32
    scf.if %8 {
      %cst_19 = arith.constant 0.000000e+00 : f32
      %25 = vector.broadcast %cst_19 : f32 to vector<1x1x1xf32>
      %c0_20 = arith.constant 0 : index
      %c0_21 = arith.constant 0 : index
      %c0_22 = arith.constant 0 : index
      %26 = vector.load %arg7[%c0_20, %c0_21, %c0_22] : memref<1x1x1xf32, #tpu.memory_space<vmem>>, vector<1x1x1xf32>
      tpu.vector_store %arg7[%c0_20, %c0_21, %c0_22], %25 {strides = array<i32>} : memref<1x1x1xf32, #tpu.memory_space<vmem>>, vector<1x1x1xf32>,
      %cst_23 = arith.constant 0.000000e+00 : f32
      %27 = vector.broadcast %cst_23 : f32 to vector<1x1x1xf32>
      %c0_24 = arith.constant 0 : index
      %c0_25 = arith.constant 0 : index
      %c0_26 = arith.constant 0 : index
      %28 = vector.load %arg8[%c0_24, %c0_25, %c0_26] : memref<1x1x1xf32, #tpu.memory_space<vmem>>, vector<1x1x1xf32>
      tpu.vector_store %arg8[%c0_24, %c0_25, %c0_26], %27 {strides = array<i32>} : memref<1x1x1xf32, #tpu.memory_space<vmem>>, vector<1x1x1xf32>,
      %cst_27 = arith.constant 0.000000e+00 : f32
      %29 = vector.broadcast %cst_27 : f32 to vector<1x1x1xf32>
      %c0_28 = arith.constant 0 : index
      %c0_29 = arith.constant 0 : index
      %c0_30 = arith.constant 0 : index
      %30 = vector.load %arg9[%c0_28, %c0_29, %c0_30] : memref<1x1x1xf32, #tpu.memory_space<vmem>>, vector<1x1x1xf32>
      tpu.vector_store %arg9[%c0_28, %c0_29, %c0_30], %29 {strides = array<i32>} : memref<1x1x1xf32, #tpu.memory_space<vmem>>, vector<1x1x1xf32>,
      %cst_31 = arith.constant 0.000000e+00 : f32
      %31 = vector.broadcast %cst_31 : f32 to vector<1x1x1xf32>
      %c0_32 = arith.constant 0 : index
      %c0_33 = arith.constant 0 : index
      %c0_34 = arith.constant 0 : index
      %32 = vector.load %arg10[%c0_32, %c0_33, %c0_34] : memref<1x1x1xf32, #tpu.memory_space<vmem>>, vector<1x1x1xf32>
      tpu.vector_store %arg10[%c0_32, %c0_33, %c0_34], %31 {strides = array<i32>} : memref<1x1x1xf32, #tpu.memory_space<vmem>>, vector<1x1x1xf32>,
      %cst_35 = arith.constant 0.000000e+00 : f32
      %33 = vector.broadcast %cst_35 : f32 to vector<1x1x1xf32>
      %c0_36 = arith.constant 0 : index
      %c0_37 = arith.constant 0 : index
      %c0_38 = arith.constant 0 : index
      %34 = vector.load %arg11[%c0_36, %c0_37, %c0_38] : memref<1x1x1xf32, #tpu.memory_space<vmem>>, vector<1x1x1xf32>
      tpu.vector_store %arg11[%c0_36, %c0_37, %c0_38], %33 {strides = array<i32>} : memref<1x1x1xf32, #tpu.memory_space<vmem>>, vector<1x1x1xf32>,
    } else {
    }
    %c0_i32_10 = arith.constant 0 : i32
    %9 = arith.cmpi eq, %arg1, %c0_i32_10 : i32
    %10 = arith.extui %9 : i1 to i32
    %c0_i32_11 = arith.constant 0 : i32
    %11 = arith.cmpi ne, %10, %c0_i32_11 : i32
    scf.if %11 {
      %cst_19 = arith.constant 0.000000e+00 : f32
      %25 = vector.broadcast %cst_19 : f32 to vector<1x16x16xf32>
      %26 = arith.select %1, %2, %25 : vector<1x16x16xi1>, vector<1x16x16xf32>
      %cst_20 = arith.constant 0.000000e+00 : f32
      %27 = vector.broadcast %cst_20 : f32 to vector<1x16x16xf32>
      %28 = arith.select %1, %3, %27 : vector<1x16x16xi1>, vector<1x16x16xf32>
      %c0_21 = arith.constant 0 : index
      %c0_22 = arith.constant 0 : index
      %c0_23 = arith.constant 0 : index
      %29 = vector.load %arg7[%c0_21, %c0_22, %c0_23] : memref<1x1x1xf32, #tpu.memory_space<vmem>>, vector<1x1x1xf32>
      %30 = arith.mulf %26, %26 : vector<1x16x16xf32>
      %cst_24 = arith.constant dense<0.000000e+00> : vector<1x16xf32>
      %31 = vector.multi_reduction <add>, %30, %cst_24 [1] : vector<1x16x16xf32> to vector<1x16xf32>
      %32 = vector.shape_cast %31 : vector<1x16xf32> to vector<1x1x16xf32>
      %cst_25 = arith.constant dense<0.000000e+00> : vector<1x1xf32>
      %33 = vector.multi_reduction <add>, %32, %cst_25 [2] : vector<1x1x16xf32> to vector<1x1xf32>
      %34 = vector.shape_cast %33 : vector<1x1xf32> to vector<1x1x1xf32>
      %35 = arith.addf %29, %34 : vector<1x1x1xf32>
      %c0_26 = arith.constant 0 : index
      %c0_27 = arith.constant 0 : index
      %c0_28 = arith.constant 0 : index
      %36 = vector.load %arg7[%c0_26, %c0_27, %c0_28] : memref<1x1x1xf32, #tpu.memory_space<vmem>>, vector<1x1x1xf32>
      tpu.vector_store %arg7[%c0_26, %c0_27, %c0_28], %35 {strides = array<i32>} : memref<1x1x1xf32, #tpu.memory_space<vmem>>, vector<1x1x1xf32>,
      %c0_29 = arith.constant 0 : index
      %c0_30 = arith.constant 0 : index
      %c0_31 = arith.constant 0 : index
      %37 = vector.load %arg8[%c0_29, %c0_30, %c0_31] : memref<1x1x1xf32, #tpu.memory_space<vmem>>, vector<1x1x1xf32>
      %cst_32 = arith.constant dense<0.000000e+00> : vector<1x16xf32>
      %38 = vector.multi_reduction <add>, %26, %cst_32 [1] : vector<1x16x16xf32> to vector<1x16xf32>
      %39 = vector.shape_cast %38 : vector<1x16xf32> to vector<1x1x16xf32>
      %cst_33 = arith.constant dense<0.000000e+00> : vector<1x1xf32>
      %40 = vector.multi_reduction <add>, %39, %cst_33 [2] : vector<1x1x16xf32> to vector<1x1xf32>
      %41 = vector.shape_cast %40 : vector<1x1xf32> to vector<1x1x1xf32>
      %42 = arith.addf %37, %41 : vector<1x1x1xf32>
      %c0_34 = arith.constant 0 : index
      %c0_35 = arith.constant 0 : index
      %c0_36 = arith.constant 0 : index
      %43 = vector.load %arg8[%c0_34, %c0_35, %c0_36] : memref<1x1x1xf32, #tpu.memory_space<vmem>>, vector<1x1x1xf32>
      tpu.vector_store %arg8[%c0_34, %c0_35, %c0_36], %42 {strides = array<i32>} : memref<1x1x1xf32, #tpu.memory_space<vmem>>, vector<1x1x1xf32>,
      %c0_37 = arith.constant 0 : index
      %c0_38 = arith.constant 0 : index
      %c0_39 = arith.constant 0 : index
      %44 = vector.load %arg9[%c0_37, %c0_38, %c0_39] : memref<1x1x1xf32, #tpu.memory_space<vmem>>, vector<1x1x1xf32>
      %cst_40 = arith.constant 1.000000e+00 : f32
      %cst_41 = arith.constant 0.000000e+00 : f32
      %45 = vector.broadcast %cst_40 : f32 to vector<1x16x16xf32>
      %46 = vector.broadcast %cst_41 : f32 to vector<1x16x16xf32>
      %47 = arith.select %1, %45, %46 : vector<1x16x16xi1>, vector<1x16x16xf32>
      %cst_42 = arith.constant dense<0.000000e+00> : vector<1x16xf32>
      %48 = vector.multi_reduction <add>, %47, %cst_42 [1] : vector<1x16x16xf32> to vector<1x16xf32>
      %49 = vector.shape_cast %48 : vector<1x16xf32> to vector<1x1x16xf32>
      %cst_43 = arith.constant dense<0.000000e+00> : vector<1x1xf32>
      %50 = vector.multi_reduction <add>, %49, %cst_43 [2] : vector<1x1x16xf32> to vector<1x1xf32>
      %51 = vector.shape_cast %50 : vector<1x1xf32> to vector<1x1x1xf32>
      %52 = arith.addf %44, %51 : vector<1x1x1xf32>
      %c0_44 = arith.constant 0 : index
      %c0_45 = arith.constant 0 : index
      %c0_46 = arith.constant 0 : index
      %53 = vector.load %arg9[%c0_44, %c0_45, %c0_46] : memref<1x1x1xf32, #tpu.memory_space<vmem>>, vector<1x1x1xf32>
      tpu.vector_store %arg9[%c0_44, %c0_45, %c0_46], %52 {strides = array<i32>} : memref<1x1x1xf32, #tpu.memory_space<vmem>>, vector<1x1x1xf32>,
      %c0_47 = arith.constant 0 : index
      %c0_48 = arith.constant 0 : index
      %c0_49 = arith.constant 0 : index
      %54 = vector.load %arg10[%c0_47, %c0_48, %c0_49] : memref<1x1x1xf32, #tpu.memory_space<vmem>>, vector<1x1x1xf32>
      %55 = arith.mulf %26, %28 : vector<1x16x16xf32>
      %cst_50 = arith.constant dense<0.000000e+00> : vector<1x16xf32>
      %56 = vector.multi_reduction <add>, %55, %cst_50 [1] : vector<1x16x16xf32> to vector<1x16xf32>
      %57 = vector.shape_cast %56 : vector<1x16xf32> to vector<1x1x16xf32>
      %cst_51 = arith.constant dense<0.000000e+00> : vector<1x1xf32>
      %58 = vector.multi_reduction <add>, %57, %cst_51 [2] : vector<1x1x16xf32> to vector<1x1xf32>
      %59 = vector.shape_cast %58 : vector<1x1xf32> to vector<1x1x1xf32>
      %60 = arith.addf %54, %59 : vector<1x1x1xf32>
      %c0_52 = arith.constant 0 : index
      %c0_53 = arith.constant 0 : index
      %c0_54 = arith.constant 0 : index
      %61 = vector.load %arg10[%c0_52, %c0_53, %c0_54] : memref<1x1x1xf32, #tpu.memory_space<vmem>>, vector<1x1x1xf32>
      tpu.vector_store %arg10[%c0_52, %c0_53, %c0_54], %60 {strides = array<i32>} : memref<1x1x1xf32, #tpu.memory_space<vmem>>, vector<1x1x1xf32>,
      %c0_55 = arith.constant 0 : index
      %c0_56 = arith.constant 0 : index
      %c0_57 = arith.constant 0 : index
      %62 = vector.load %arg11[%c0_55, %c0_56, %c0_57] : memref<1x1x1xf32, #tpu.memory_space<vmem>>, vector<1x1x1xf32>
      %cst_58 = arith.constant dense<0.000000e+00> : vector<1x16xf32>
      %63 = vector.multi_reduction <add>, %28, %cst_58 [1] : vector<1x16x16xf32> to vector<1x16xf32>
      %64 = vector.shape_cast %63 : vector<1x16xf32> to vector<1x1x16xf32>
      %cst_59 = arith.constant dense<0.000000e+00> : vector<1x1xf32>
      %65 = vector.multi_reduction <add>, %64, %cst_59 [2] : vector<1x1x16xf32> to vector<1x1xf32>
      %66 = vector.shape_cast %65 : vector<1x1xf32> to vector<1x1x1xf32>
      %67 = arith.addf %62, %66 : vector<1x1x1xf32>
      %c0_60 = arith.constant 0 : index
      %c0_61 = arith.constant 0 : index
      %c0_62 = arith.constant 0 : index
      %68 = vector.load %arg11[%c0_60, %c0_61, %c0_62] : memref<1x1x1xf32, #tpu.memory_space<vmem>>, vector<1x1x1xf32>
      tpu.vector_store %arg11[%c0_60, %c0_61, %c0_62], %67 {strides = array<i32>} : memref<1x1x1xf32, #tpu.memory_space<vmem>>, vector<1x1x1xf32>,
    } else {
    }
    %c1_i32 = arith.constant 1 : i32
    %12 = arith.cmpi eq, %arg1, %c1_i32 : i32
    %c0_i32_12 = arith.constant 0 : i32
    %13 = arith.cmpi eq, %arg2, %c0_i32_12 : i32
    %14 = arith.andi %12, %13 : i1
    %15 = arith.extui %14 : i1 to i32
    %c0_i32_13 = arith.constant 0 : i32
    %16 = arith.cmpi ne, %15, %c0_i32_13 : i32
    scf.if %16 {
      %c0_19 = arith.constant 0 : index
      %c0_20 = arith.constant 0 : index
      %c0_21 = arith.constant 0 : index
      %25 = vector.load %arg7[%c0_19, %c0_20, %c0_21] : memref<1x1x1xf32, #tpu.memory_space<vmem>>, vector<1x1x1xf32>
      %c0_22 = arith.constant 0 : index
      %c0_23 = arith.constant 0 : index
      %c0_24 = arith.constant 0 : index
      %26 = vector.load %arg8[%c0_22, %c0_23, %c0_24] : memref<1x1x1xf32, #tpu.memory_space<vmem>>, vector<1x1x1xf32>
      %c0_25 = arith.constant 0 : index
      %c0_26 = arith.constant 0 : index
      %c0_27 = arith.constant 0 : index
      %27 = vector.load %arg9[%c0_25, %c0_26, %c0_27] : memref<1x1x1xf32, #tpu.memory_space<vmem>>, vector<1x1x1xf32>
      %c0_28 = arith.constant 0 : index
      %c0_29 = arith.constant 0 : index
      %c0_30 = arith.constant 0 : index
      %28 = vector.load %arg10[%c0_28, %c0_29, %c0_30] : memref<1x1x1xf32, #tpu.memory_space<vmem>>, vector<1x1x1xf32>
      %c0_31 = arith.constant 0 : index
      %c0_32 = arith.constant 0 : index
      %c0_33 = arith.constant 0 : index
      %29 = vector.load %arg11[%c0_31, %c0_32, %c0_33] : memref<1x1x1xf32, #tpu.memory_space<vmem>>, vector<1x1x1xf32>
      %30 = arith.mulf %25, %27 : vector<1x1x1xf32>
      %31 = arith.mulf %26, %26 : vector<1x1x1xf32>
      %32 = arith.subf %30, %31 : vector<1x1x1xf32>
      %cst_34 = arith.constant 0.000000e+00 : f32
      %33 = vector.broadcast %cst_34 : f32 to vector<1x1x1xf32>
      %34 = arith.cmpf ogt, %32, %33 : vector<1x1x1xf32>
      %cst_35 = arith.constant 1.000000e+00 : f32
      %35 = vector.broadcast %cst_35 : f32 to vector<1x1x1xf32>
      %36 = arith.select %34, %32, %35 : vector<1x1x1xi1>, vector<1x1x1xf32>
      %37 = arith.mulf %27, %28 : vector<1x1x1xf32>
      %38 = arith.mulf %26, %29 : vector<1x1x1xf32>
      %39 = arith.subf %37, %38 : vector<1x1x1xf32>
      %40 = arith.divf %39, %36 : vector<1x1x1xf32>
      %cst_36 = arith.constant 0.000000e+00 : f32
      %41 = vector.broadcast %cst_36 : f32 to vector<1x1x1xf32>
      %42 = arith.select %34, %40, %41 : vector<1x1x1xi1>, vector<1x1x1xf32>
      %c0_37 = arith.constant 0 : index
      %c0_38 = arith.constant 0 : index
      %c0_39 = arith.constant 0 : index
      %43 = vector.load %arg12[%c0_37, %c0_38, %c0_39] : memref<1x1x1xf32, #tpu.memory_space<vmem>>, vector<1x1x1xf32>
      tpu.vector_store %arg12[%c0_37, %c0_38, %c0_39], %42 {strides = array<i32>} : memref<1x1x1xf32, #tpu.memory_space<vmem>>, vector<1x1x1xf32>,
      %cst_40 = arith.constant 0.000000e+00 : f32
      %44 = vector.broadcast %cst_40 : f32 to vector<1x1x1xf32>
      %45 = arith.subf %44, %26 : vector<1x1x1xf32>
      %46 = arith.mulf %45, %28 : vector<1x1x1xf32>
      %47 = arith.mulf %25, %29 : vector<1x1x1xf32>
      %48 = arith.addf %46, %47 : vector<1x1x1xf32>
      %49 = arith.divf %48, %36 : vector<1x1x1xf32>
      %cst_41 = arith.constant 0.000000e+00 : f32
      %50 = vector.broadcast %cst_41 : f32 to vector<1x1x1xf32>
      %51 = arith.select %34, %49, %50 : vector<1x1x1xi1>, vector<1x1x1xf32>
      %c0_42 = arith.constant 0 : index
      %c0_43 = arith.constant 0 : index
      %c0_44 = arith.constant 0 : index
      %52 = vector.load %arg13[%c0_42, %c0_43, %c0_44] : memref<1x1x1xf32, #tpu.memory_space<vmem>>, vector<1x1x1xf32>
      tpu.vector_store %arg13[%c0_42, %c0_43, %c0_44], %51 {strides = array<i32>} : memref<1x1x1xf32, #tpu.memory_space<vmem>>, vector<1x1x1xf32>,
      %cst_45 = arith.constant 0.000000e+00 : f32
      %53 = vector.broadcast %cst_45 : f32 to vector<1x1x1xf32>
      %c0_46 = arith.constant 0 : index
      %c0_47 = arith.constant 0 : index
      %c0_48 = arith.constant 0 : index
      %54 = vector.load %arg14[%c0_46, %c0_47, %c0_48] : memref<1x1x1xf32, #tpu.memory_space<vmem>>, vector<1x1x1xf32>
      tpu.vector_store %arg14[%c0_46, %c0_47, %c0_48], %53 {strides = array<i32>} : memref<1x1x1xf32, #tpu.memory_space<vmem>>, vector<1x1x1xf32>,
    } else {
    }
    %c1_i32_14 = arith.constant 1 : i32
    %17 = arith.cmpi eq, %arg1, %c1_i32_14 : i32
    %18 = arith.extui %17 : i1 to i32
    %c0_i32_15 = arith.constant 0 : i32
    %19 = arith.cmpi ne, %18, %c0_i32_15 : i32
    scf.if %19 {
      %c0_19 = arith.constant 0 : index
      %c0_20 = arith.constant 0 : index
      %c0_21 = arith.constant 0 : index
      %25 = vector.load %arg12[%c0_19, %c0_20, %c0_21] : memref<1x1x1xf32, #tpu.memory_space<vmem>>, vector<1x1x1xf32>
      %26 = vector.broadcast %25 : vector<1x1x1xf32> to vector<1x16x16xf32>
      %27 = arith.mulf %26, %2 : vector<1x16x16xf32>
      %c0_22 = arith.constant 0 : index
      %c0_23 = arith.constant 0 : index
      %c0_24 = arith.constant 0 : index
      %28 = vector.load %arg13[%c0_22, %c0_23, %c0_24] : memref<1x1x1xf32, #tpu.memory_space<vmem>>, vector<1x1x1xf32>
      %29 = vector.broadcast %28 : vector<1x1x1xf32> to vector<1x16x16xf32>
      %30 = arith.addf %27, %29 : vector<1x16x16xf32>
      %31 = arith.subf %30, %3 : vector<1x16x16xf32>
      %32 = math.absf %31 : vector<1x16x16xf32>
      %c0_25 = arith.constant 0 : index
      %c0_26 = arith.constant 0 : index
      %c0_27 = arith.constant 0 : index
      %33 = vector.load %arg14[%c0_25, %c0_26, %c0_27] : memref<1x1x1xf32, #tpu.memory_space<vmem>>, vector<1x1x1xf32>
      %cst_28 = arith.constant 0.000000e+00 : f32
      %34 = vector.broadcast %cst_28 : f32 to vector<1x16x16xf32>
      %35 = arith.select %1, %32, %34 : vector<1x16x16xi1>, vector<1x16x16xf32>
      %cst_29 = arith.constant dense<0.000000e+00> : vector<1x16xf32>
      %36 = vector.multi_reduction <add>, %35, %cst_29 [1] : vector<1x16x16xf32> to vector<1x16xf32>
      %37 = vector.shape_cast %36 : vector<1x16xf32> to vector<1x1x16xf32>
      %cst_30 = arith.constant dense<0.000000e+00> : vector<1x1xf32>
      %38 = vector.multi_reduction <add>, %37, %cst_30 [2] : vector<1x1x16xf32> to vector<1x1xf32>
      %39 = vector.shape_cast %38 : vector<1x1xf32> to vector<1x1x1xf32>
      %40 = arith.addf %33, %39 : vector<1x1x1xf32>
      %c0_31 = arith.constant 0 : index
      %c0_32 = arith.constant 0 : index
      %c0_33 = arith.constant 0 : index
      %41 = vector.load %arg14[%c0_31, %c0_32, %c0_33] : memref<1x1x1xf32, #tpu.memory_space<vmem>>, vector<1x1x1xf32>
      tpu.vector_store %arg14[%c0_31, %c0_32, %c0_33], %40 {strides = array<i32>} : memref<1x1x1xf32, #tpu.memory_space<vmem>>, vector<1x1x1xf32>,
    } else {
    }
    %c1_i32_16 = arith.constant 1 : i32
    %20 = arith.cmpi eq, %arg1, %c1_i32_16 : i32
    %c0_i32_17 = arith.constant 0 : i32
    %21 = arith.cmpi eq, %arg2, %c0_i32_17 : i32
    %22 = arith.andi %20, %21 : i1
    %23 = arith.extui %22 : i1 to i32
    %c0_i32_18 = arith.constant 0 : i32
    %24 = arith.cmpi ne, %23, %c0_i32_18 : i32
    scf.if %24 {
      %c0_19 = arith.constant 0 : index
      %c0_20 = arith.constant 0 : index
      %c0_21 = arith.constant 0 : index
      %25 = vector.load %arg14[%c0_19, %c0_20, %c0_21] : memref<1x1x1xf32, #tpu.memory_space<vmem>>, vector<1x1x1xf32>
      %c0_22 = arith.constant 0 : index
      %c0_23 = arith.constant 0 : index
      %c0_24 = arith.constant 0 : index
      %26 = vector.load %arg6[%c0_22, %c0_23, %c0_24] : memref<1x1x2xf32, #tpu.memory_space<vmem>>, vector<1x1x1xf32>
      tpu.vector_store %arg6[%c0_22, %c0_23, %c0_24], %25 {strides = array<i32>} : memref<1x1x2xf32, #tpu.memory_space<vmem>>, vector<1x1x1xf32>,
      %c0_25 = arith.constant 0 : index
      %c0_26 = arith.constant 0 : index
      %c0_27 = arith.constant 0 : index
      %27 = vector.load %arg9[%c0_25, %c0_26, %c0_27] : memref<1x1x1xf32, #tpu.memory_space<vmem>>, vector<1x1x1xf32>
      %c0_28 = arith.constant 0 : index
      %c0_29 = arith.constant 0 : index
      %c1 = arith.constant 1 : index
      %28 = vector.load %arg6[%c0_28, %c0_29, %c1] : memref<1x1x2xf32, #tpu.memory_space<vmem>>, vector<1x1x1xf32>
      tpu.vector_store %arg6[%c0_28, %c0_29, %c1], %27 {strides = array<i32>} : memref<1x1x2xf32, #tpu.memory_space<vmem>>, vector<1x1x1xf32>,
    } else {
    }
    return
  }
  func.func @transform_0(%arg0: i32, %arg1: i32, %arg2: i32) -> (i32, i32, i32) {
    %c0_i32 = arith.constant 0 : i32
    %c0_i32_0 = arith.constant 0 : i32
    return %arg0, %arg2, %c0_i32 : i32, i32, i32
  }
  func.func @transform_1(%arg0: i32, %arg1: i32, %arg2: i32) -> (i32, i32, i32) {
    %c0_i32 = arith.constant 0 : i32
    %c0_i32_0 = arith.constant 0 : i32
    return %arg0, %arg2, %c0_i32 : i32, i32, i32
  }
  func.func @transform_2(%arg0: i32, %arg1: i32, %arg2: i32) -> (i32, i32, i32) {
    %c0_i32 = arith.constant 0 : i32
    %c0_i32_0 = arith.constant 0 : i32
    return %arg0, %arg2, %c0_i32 : i32, i32, i32
  }
  func.func @transform_3(%arg0: i32, %arg1: i32, %arg2: i32) -> (i32, i32, i32) {
    %c0_i32 = arith.constant 0 : i32
    %c0_i32_0 = arith.constant 0 : i32
    %c0_i32_1 = arith.constant 0 : i32
    return %arg0, %c0_i32, %c0_i32_0 : i32, i32, i32
  }
}

</mosaic_0001>

<llo_original>
// kernel: tpu_custom_call.1
$region0: #{tpu_custom_call.1}
  #allocation0 [shape = 'u32[]', space=smem, size = 0x4, offset = 0x4, fixed_abs, tag = 'smem constant byte address 0x4 - core index']
  #allocation1 [shape = 'u32[144,128]{1,0:T(1,128)}', space=vmem, size = 0x12000, scoped, tag = 'internal scratch']
  #allocation2 [shape = 'f32[1,1,1]{2,1,0:T(1,128)}', space=vmem, size = 0x200, scoped, tag = 'scratch operand']
  #allocation3 [shape = 'f32[1,1,1]{2,1,0:T(1,128)}', space=vmem, size = 0x200, scoped, tag = 'scratch operand']
  #allocation4 [shape = 'f32[1,1,1]{2,1,0:T(1,128)}', space=vmem, size = 0x200, scoped, tag = 'scratch operand']
  #allocation5 [shape = 'f32[1,1,1]{2,1,0:T(1,128)}', space=vmem, size = 0x200, scoped, tag = 'scratch operand']
  #allocation6 [shape = 'f32[1,1,1]{2,1,0:T(1,128)}', space=vmem, size = 0x200, scoped, tag = 'scratch operand']
  #allocation7 [shape = 'f32[1,1,1]{2,1,0:T(1,128)}', space=vmem, size = 0x200, scoped, tag = 'scratch operand']
  #allocation8 [shape = 'f32[1,1,1]{2,1,0:T(1,128)}', space=vmem, size = 0x200, scoped, tag = 'scratch operand']
  #allocation9 [shape = 'f32[1,1,1]{2,1,0:T(1,128)}', space=vmem, size = 0x200, scoped, tag = 'scratch operand']
  %s0 = inlined_call_operand.vmem [shape: f32[2,16,16], index: 0, kind: input, shape index: {}]
  %s1 = inlined_call_operand.hbm [shape: f32[2,16,16], index: 1, kind: input, shape index: {}]
  %s2 = inlined_call_operand.vmem [shape: s32[2,16,16], index: 2, kind: input, shape index: {}]
  %s3 = inlined_call_operand.hbm [shape: f32[2,1,2], index: 3, kind: output, shape index: {}]
  %s4 = sld [smem:[#allocation0]]
  $region69: #{tpu_custom_call.1} parent=0
    _
  %s6 = ssub.s32 1, %s4
  %s7 = scalar_select 0, %s6, %s4
  $region1: #{tpu_custom_call.1} parent=0
    #allocation10 [shape = 'u8[16384]{0}', space=vmem, size = 0x4000, scoped, tag = 'input window, operand 1']
    #allocation11 [shape = 's32[2]{0}', space=sflag, size = 0x8, scoped, tag = 'scoped memory for tpu_custom_call.1']
    #allocation12 [shape = 's32[2]{0}', space=sflag, size = 0x8, scoped, tag = 'scoped memory for tpu_custom_call.1']
    #allocation13 [shape = 'u8[1024]{0}', space=vmem, size = 0x400, scoped, tag = 'output window, operand 0']
    %8 = vsyncpa [#allocation11], 0
    %s9 = scalar_lea.sflag [#allocation11], 1
    %10 = vsyncpa %s9, 0
    %11 = vsyncpa [#allocation12], 0
    %s12 = scalar_lea.sflag [#allocation12], 1
    %13 = vsyncpa %s12, 0
    loop: start=0, step=1, limit=6
    $region2: #{tpu_custom_call.1} parent=1 // loop_pre_header
      _
    $region3: #{tpu_custom_call.1} parent=1 // loop_header
      %s15 = sphi 0, %s19
      %p16 = scmp.ge.s32.totalorder %s15, 6
      %s22 = sphi 0, %s41
      %s23 = sphi 0, %s37
      %s24 = sphi 0, %s33
      %s25 = sphi 0, %s22
      %s26 = sphi 0, %s23
      %s27 = sphi 0, %s24
      %s28 = sphi 0, %s25
      %s29 = sphi 0, %s26
      %s30 = sphi 0, %s27
      %s46 = sphi 0, %s48
      %s49 = sphi 0, %s46
      %s50 = sphi 0, %s49
      %s66 = sphi 0, %s50
      %s74 = sphi 0, %s76
      %s77 = sphi 0, %s74
      %s78 = sphi 0, %s77
      %s94 = sphi 0, %s78
      %s102 = sphi 0, %s104
      %s105 = sphi 0, %s102
      %s106 = sphi 0, %s105
      %s122 = sphi 0, %s106
      %s128 = sphi 0, %s130
      %s131 = sphi 0, %s128
      %s132 = sphi 0, %s131
      %s148 = sphi 0, %s132
    $region4: #{tpu_custom_call.1} parent=1 // loop_header_branch
      %18 = sbr.rel (%p16) target = $region8
    $region5: #{tpu_custom_call.1} parent=1 // loop_body
      %s20 = ssub.s32 %s15, 1
      %s21 = ssub.s32 %s15, 2
      %s31 = sadd.s32 1, %s24
      %p32 = scmp.ge.s32.totalorder %s31, 1
      %s33 = scalar_select %p32, 0, %s31
      %s34 = sadd.s32 1, %s23
      %s35 = scalar_select %p32, %s34, %s23
      %p36 = scmp.ge.s32.totalorder %s35, 2
      %s37 = scalar_select %p36, 0, %s35
      %s38 = sadd.s32 1, %s22
      %s39 = scalar_select %p36, %s38, %s22
      %p40 = scmp.ge.s32.totalorder %s39, 2
      %s41 = scalar_select %p40, 0, %s39
      %s42 = ssub.s32 %s22, %s41
      %s43 = ssub.s32 %s24, %s33
      %s44 = sor.u32 %s42, %s43
      %p45 = scmp.eq.s32.totalorder %s44, 0
      %s47 = sadd.s32 %s46, 1
      %s48 = scalar_select %p45, %s46, %s47
      %p51 = pneg %p45
      %p52 = scmp.eq.s32.totalorder %s15, 3
      %p53 = por %p51, %p52
      %p54 = scmp.ne.s32.totalorder %s46, %s49
      %p55 = scmp.eq.s32.totalorder %s15, 0
      %p56 = por %p54, %p55
      %p57 = scmp.ne.s32.totalorder %s46, %s49
      %p58 = scmp.eq.s32.totalorder %s20, 3
      %p59 = por %p57, %p58
      %p60 = scmp.ne.s32.totalorder %s49, %s50
      %p61 = scmp.eq.s32.totalorder %s20, 0
      %p62 = por %p60, %p61
      %p63 = scmp.ne.s32.totalorder %s49, %s50
      %p64 = scmp.eq.s32.totalorder %s21, 3
      %p65 = por %p63, %p64
      %p67 = scmp.ne.s32.totalorder %s50, %s66
      %p68 = scmp.eq.s32.totalorder %s21, 0
      %p69 = por %p67, %p68
      %s70 = ssub.s32 %s22, %s41
      %s71 = ssub.s32 %s24, %s33
      %s72 = sor.u32 %s70, %s71
      %p73 = scmp.eq.s32.totalorder %s72, 0
      %s75 = sadd.s32 %s74, 1
      %s76 = scalar_select %p73, %s74, %s75
      %p79 = pneg %p73
      %p80 = scmp.eq.s32.totalorder %s15, 3
      %p81 = por %p79, %p80
      %p82 = scmp.ne.s32.totalorder %s74, %s77
      %p83 = scmp.eq.s32.totalorder %s15, 0
      %p84 = por %p82, %p83
      %p85 = scmp.ne.s32.totalorder %s74, %s77
      %p86 = scmp.eq.s32.totalorder %s20, 3
      %p87 = por %p85, %p86
      %p88 = scmp.ne.s32.totalorder %s77, %s78
      %p89 = scmp.eq.s32.totalorder %s20, 0
      %p90 = por %p88, %p89
      %p91 = scmp.ne.s32.totalorder %s77, %s78
      %p92 = scmp.eq.s32.totalorder %s21, 3
      %p93 = por %p91, %p92
      %p95 = scmp.ne.s32.totalorder %s78, %s94
      %p96 = scmp.eq.s32.totalorder %s21, 0
      %p97 = por %p95, %p96
      %s98 = ssub.s32 %s22, %s41
      %s99 = ssub.s32 %s24, %s33
      %s100 = sor.u32 %s98, %s99
      %p101 = scmp.eq.s32.totalorder %s100, 0
      %s103 = sadd.s32 %s102, 1
      %s104 = scalar_select %p101, %s102, %s103
      %p107 = pneg %p101
      %p108 = scmp.eq.s32.totalorder %s15, 3
      %p109 = por %p107, %p108
      %p110 = scmp.ne.s32.totalorder %s102, %s105
      %p111 = scmp.eq.s32.totalorder %s15, 0
      %p112 = por %p110, %p111
      %p113 = scmp.ne.s32.totalorder %s102, %s105
      %p114 = scmp.eq.s32.totalorder %s20, 3
      %p115 = por %p113, %p114
      %p116 = scmp.ne.s32.totalorder %s105, %s106
      %p117 = scmp.eq.s32.totalorder %s20, 0
      %p118 = por %p116, %p117
      %p119 = scmp.ne.s32.totalorder %s105, %s106
      %p120 = scmp.eq.s32.totalorder %s21, 3
      %p121 = por %p119, %p120
      %p123 = scmp.ne.s32.totalorder %s106, %s122
      %p124 = scmp.eq.s32.totalorder %s21, 0
      %p125 = por %p123, %p124
      %s126 = ssub.s32 %s22, %s41
      %p127 = scmp.eq.s32.totalorder %s126, 0
      %s129 = sadd.s32 %s128, 1
      %s130 = scalar_select %p127, %s128, %s129
      %p133 = pneg %p127
      %p134 = scmp.eq.s32.totalorder %s15, 3
      %p135 = por %p133, %p134
      %p136 = scmp.ne.s32.totalorder %s128, %s131
      %p137 = scmp.eq.s32.totalorder %s15, 0
      %p138 = por %p136, %p137
      %p139 = scmp.ne.s32.totalorder %s128, %s131
      %p140 = scmp.eq.s32.totalorder %s20, 3
      %p141 = por %p139, %p140
      %p142 = scmp.ne.s32.totalorder %s131, %s132
      %p143 = scmp.eq.s32.totalorder %s20, 0
      %p144 = por %p142, %p143
      %p145 = scmp.ne.s32.totalorder %s131, %s132
      %p146 = scmp.eq.s32.totalorder %s21, 3
      %p147 = por %p145, %p146
      %p149 = scmp.ne.s32.totalorder %s132, %s148
      %p150 = scmp.eq.s32.totalorder %s21, 0
      %p151 = por %p149, %p150
      %p152 = scmp.le.s32.totalorder 1, %s15
      %p153 = scmp.lt.s32.totalorder %s15, 5
      %p154 = pnand %p152, %p153
      %p155 = pneg %p154
      // Predicated region
      $region9: #{tpu_custom_call.1} parent=5 // pred_check
        _
      $region10: #{tpu_custom_call.1} parent=5 // pred_check_branch
        %157 = sbr.rel (%p154) target = $region12
      $region11: #{tpu_custom_call.1} parent=5 // pred_region
        %s158 = ssub.s32 %s15, 1
      $region12: #{tpu_custom_call.1} parent=5 // pred_fallthru
        _
      %p159 = scmp.lt.s32.totalorder %s15, 4
      // Predicated region
      $region13: #{tpu_custom_call.1} parent=5 // pred_check
        %p160 = pneg %p159
      $region14: #{tpu_custom_call.1} parent=5 // pred_check_branch
        %162 = sbr.rel (%p160) target = $region16
      $region15: #{tpu_custom_call.1} parent=5 // pred_region
        // Predicated region
        $region17: #{tpu_custom_call.1} parent=15 // pred_check
          %p163 = pneg %p56
        $region18: #{tpu_custom_call.1} parent=15 // pred_check_branch
          %165 = sbr.rel (%p163) target = $region20
        $region19: #{tpu_custom_call.1} parent=15 // pred_region
          %s166 = smul.u32 2, %s24
          %p167 = scmp.lt.s32.totalorder %s22, 1
          %s168 = scalar_select %p167, %s22, 1
          %p169 = scmp.lt.s32.totalorder %s166, 1
          %s170 = scalar_select %p169, %s166, 1
          %s171 = smul.addr %s168, 2
          %s172 = sadd.s32 %s170, %s171
          %s173 = smul.addr %s172, 8
          %s174 = scalar_lea.vmem %s0, %s173
          %s175 = smul.u32 2, %s24
        $region20: #{tpu_custom_call.1} parent=15 // pred_fallthru
          _
        // Predicated region
        $region21: #{tpu_custom_call.1} parent=15 // pred_check
          %p176 = pneg %p84
        $region22: #{tpu_custom_call.1} parent=15 // pred_check_branch
          %178 = sbr.rel (%p176) target = $region24
        $region23: #{tpu_custom_call.1} parent=15 // pred_region
          %s179 = sand.u32 %s74, 1
          %s180 = scalar_lea.sflag [#allocation11], %s179
          %s181 = sand.u32 %s74, 1
          %s182 = smul.addr %s181, 16
          %s183 = scalar_lea.vmem [#allocation10], %s182
          %s184 = smul.u32 2, %s24
          %s186 = ssub.s32 256, 256
          %187 = vsyncadd %s180, %s186
          %s188 = smul.addr %s22, 2
          %s189 = sadd.s32 %s184, %s188
          %s190 = smul.addr %s189, 128
          %s191 = scalar_lea.hbm %s1, %s190
          %s192 = sshll.u32 %s183, 4
          %s193 = int_to_ptr.vmem [resolvable:$true] %s192
          %198 = dma.hbm_to_vmem [thread:$0]  %s191, 256, %s193, %s180, 128, 128, 8
        $region24: #{tpu_custom_call.1} parent=15 // pred_fallthru
          _
        // Predicated region
        $region25: #{tpu_custom_call.1} parent=15 // pred_check
          %p199 = pneg %p112
        $region26: #{tpu_custom_call.1} parent=15 // pred_check_branch
          %201 = sbr.rel (%p199) target = $region28
        $region27: #{tpu_custom_call.1} parent=15 // pred_region
          %s202 = smul.u32 2, %s24
          %p203 = scmp.lt.s32.totalorder %s22, 1
          %s204 = scalar_select %p203, %s22, 1
          %p205 = scmp.lt.s32.totalorder %s202, 1
          %s206 = scalar_select %p205, %s202, 1
          %s207 = smul.addr %s204, 2
          %s208 = sadd.s32 %s206, %s207
          %s209 = smul.addr %s208, 8
          %s210 = scalar_lea.vmem %s2, %s209
          %s211 = smul.u32 2, %s24
        $region28: #{tpu_custom_call.1} parent=15 // pred_fallthru
          _
      $region16: #{tpu_custom_call.1} parent=5 // pred_fallthru
        _
      %p212 = scmp.le.s32.totalorder 1, %s15
      %p213 = scmp.lt.s32.totalorder %s15, 5
      %p214 = pnand %p212, %p213
      %p215 = pneg %p214
      // Predicated region
      $region29: #{tpu_custom_call.1} parent=5 // pred_check
        _
      $region30: #{tpu_custom_call.1} parent=5 // pred_check_branch
        %217 = sbr.rel (%p214) target = $region32
      $region31: #{tpu_custom_call.1} parent=5 // pred_region
        %s218 = ssub.s32 %s15, 1
        %s219 = sand.u32 %s77, 1
        %s220 = scalar_lea.sflag [#allocation11], %s219
        %s221 = sand.u32 %s77, 1
        %s222 = smul.addr %s221, 16
        %s223 = scalar_lea.vmem [#allocation10], %s222
        // Predicated region
        $region33: #{tpu_custom_call.1} parent=31 // pred_check
          %p224 = pneg %p90
        $region34: #{tpu_custom_call.1} parent=31 // pred_check_branch
          %226 = sbr.rel (%p224) target = $region36
        $region35: #{tpu_custom_call.1} parent=31 // pred_region
          %227 = dma.done %s220, 256
        $region36: #{tpu_custom_call.1} parent=31 // pred_fallthru
          _
        %s228 = smul.u32 2, %s27
        %p229 = scmp.lt.s32.totalorder %s25, 1
        %s230 = scalar_select %p229, %s25, 1
        %p231 = scmp.lt.s32.totalorder %s228, 1
        %s232 = scalar_select %p231, %s228, 1
        %s233 = smul.addr %s230, 2
        %s234 = sadd.s32 %s232, %s233
        %s235 = smul.addr %s234, 8
        %s236 = scalar_lea.vmem %s0, %s235
        %p237 = pneg %p62
        %p238 = pneg %p59
        %s239 = sand.u32 %s77, 1
        %s240 = scalar_lea.sflag [#allocation11], %s239
        %s241 = sand.u32 %s77, 1
        %s242 = smul.addr %s241, 16
        %s243 = scalar_lea.vmem [#allocation10], %s242
        %p244 = pneg %p90
        %p245 = pneg %p87
        %s246 = smul.u32 2, %s27
        %p247 = scmp.lt.s32.totalorder %s25, 1
        %s248 = scalar_select %p247, %s25, 1
        %p249 = scmp.lt.s32.totalorder %s246, 1
        %s250 = scalar_select %p249, %s246, 1
        %s251 = smul.addr %s248, 2
        %s252 = sadd.s32 %s250, %s251
        %s253 = smul.addr %s252, 8
        %s254 = scalar_lea.vmem %s2, %s253
        %p255 = pneg %p118
        %p256 = pneg %p115
        %p257 = pneg %p144
        %p258 = pneg %p141
        %s259 = sand.u32 %s131, 1
        %s260 = scalar_lea.sflag [#allocation12], %s259
        %s261 = sand.u32 %s131, 1
        %s262 = scalar_lea.vmem [#allocation13], %s261
        %s263 = smul.u32 2, %s27
        %p264 = scmp.lt.s32.totalorder %s25, 1
        %s265 = scalar_select %p264, %s25, 1
        %p266 = scmp.lt.s32.totalorder %s263, 1
        %s267 = scalar_select %p266, %s263, 1
        %s268 = smul.addr %s265, 2
        %s269 = sadd.s32 %s267, %s268
        %s270 = smul.addr %s269, 8
        %s271 = scalar_lea.vmem %s0, %s270
        %s272 = smul.u32 2, %s27
        %s273 = smul.u32 2, %s27
        %s274 = smul.u32 2, %s27
        %p275 = scmp.lt.s32.totalorder %s25, 1
        %s276 = scalar_select %p275, %s25, 1
        %p277 = scmp.lt.s32.totalorder %s274, 1
        %s278 = scalar_select %p277, %s274, 1
        %s279 = smul.addr %s276, 2
        %s280 = sadd.s32 %s278, %s279
        %s281 = smul.addr %s280, 8
        %s282 = scalar_lea.vmem %s2, %s281
        %s283 = smul.u32 2, %s27
        %v284 = vld [vmem:[%s282] sm:$0xff]
        %v285 = vld [vmem:[%s282 + $0x8] sm:$0xff]
        %vm286 = vcmp.ne.s32.totalorder %v284, 0
        %vm287 = vcmp.ne.s32.totalorder %v285, 0
        %v288 = vld [vmem:[%s271] sm:$0xff]
        %v289 = vld [vmem:[%s271 + $0x8] sm:$0xff]
        %v290 = vld [vmem:[%s223] sm:$0xff]
        %v291 = vld [vmem:[%s223 + $0x8] sm:$0xff]
        %p292 = scmp.eq.s32.totalorder %s26, 0
        %p293 = scmp.eq.s32.totalorder %s27, 0
        %p294 = pnand %p292, %p293
        %p295 = pneg %p294
        // Predicated region
        $region37: #{tpu_custom_call.1} parent=31 // pred_check
          _
        $region38: #{tpu_custom_call.1} parent=31 // pred_check_branch
          %297 = sbr.rel (%p294) target = $region40
        $region39: #{tpu_custom_call.1} parent=31 // pred_region
          %vm298 = vcmask 0
          %299 = vst.msk [vmem:[#allocation2] sm:$0x1] %vm298, 0.0
          %300 = vst.msk [vmem:[#allocation3] sm:$0x1] %vm298, 0.0
          %301 = vst.msk [vmem:[#allocation4] sm:$0x1] %vm298, 0.0
          %302 = vst.msk [vmem:[#allocation5] sm:$0x1] %vm298, 0.0
          %303 = vst.msk [vmem:[#allocation6] sm:$0x1] %vm298, 0.0
        $region40: #{tpu_custom_call.1} parent=31 // pred_fallthru
          _
        // Predicated region
        $region41: #{tpu_custom_call.1} parent=31 // pred_check
          %p304 = pneg %p292
        $region42: #{tpu_custom_call.1} parent=31 // pred_check_branch
          %306 = sbr.rel (%p304) target = $region44
        $region43: #{tpu_custom_call.1} parent=31 // pred_region
          %v307 = vsel %vm286, %v288, 0.0
          %v308 = vsel %vm287, %v289, 0.0
          %v309 = vsel %vm286, %v290, 0.0
          %v310 = vsel %vm287, %v291, 0.0
          %v311 = vld [vmem:[#allocation2] sm:$0x1]
          %v312 = vmul.f32 %v307, %v307
          %v313 = vmul.f32 %v308, %v308
          %vm314 = vcmask 130048
          %v315 = vsel %vm314, %v312, 0.0
          %v316 = vsel %vm314, %v313, 0.0
          %v317 = vadd.f32 %v315, %v316
          %v318 = vrot.slane %v317, 4
          %v319 = vadd.f32 %v317, %v318
          %v320 = vrot.slane %v319, 2
          %v321 = vadd.f32 %v319, %v320
          %v322 = vrot.slane %v321, 1
          %v323 = vadd.f32 %v321, %v322
          %v324 = vsel %vm314, %v323, 0.0
          %325 = vadd.xlane.f32.xlu0 %v324
          %v326 = vpop.xlane.xlu0 %325
          %v327 = vadd.f32 %v311, %v326
          %vm328 = vcmask 0
          %329 = vst.msk [vmem:[#allocation2] sm:$0x1] %vm328, %v327
          %v330 = vld [vmem:[#allocation3] sm:$0x1]
          %v331 = vsel %vm314, %v307, 0.0
          %v332 = vsel %vm314, %v308, 0.0
          %v333 = vadd.f32 %v331, %v332
          %v334 = vrot.slane %v333, 4
          %v335 = vadd.f32 %v333, %v334
          %v336 = vrot.slane %v335, 2
          %v337 = vadd.f32 %v335, %v336
          %v338 = vrot.slane %v337, 1
          %v339 = vadd.f32 %v337, %v338
          %v340 = vsel %vm314, %v339, 0.0
          %341 = vadd.xlane.f32.xlu0 %v340
          %v342 = vpop.xlane.xlu0 %341
          %v343 = vadd.f32 %v330, %v342
          %344 = vst.msk [vmem:[#allocation3] sm:$0x1] %vm328, %v343
          %v345 = vld [vmem:[#allocation4] sm:$0x1]
          %v346 = vsel %vm286, 1.0, 0.0
          %v347 = vsel %vm287, 1.0, 0.0
          %v348 = vsel %vm314, %v346, 0.0
          %v349 = vsel %vm314, %v347, 0.0
          %v350 = vadd.f32 %v348, %v349
          %v351 = vrot.slane %v350, 4
          %v352 = vadd.f32 %v350, %v351
          %v353 = vrot.slane %v352, 2
          %v354 = vadd.f32 %v352, %v353
          %v355 = vrot.slane %v354, 1
          %v356 = vadd.f32 %v354, %v355
          %v357 = vsel %vm314, %v356, 0.0
          %358 = vadd.xlane.f32.xlu0 %v357
          %v359 = vpop.xlane.xlu0 %358
          %v360 = vadd.f32 %v345, %v359
          %361 = vst.msk [vmem:[#allocation4] sm:$0x1] %vm328, %v360
          %v362 = vld [vmem:[#allocation5] sm:$0x1]
          %v363 = vmul.f32 %v307, %v309
          %v364 = vmul.f32 %v308, %v310
          %v365 = vsel %vm314, %v363, 0.0
          %v366 = vsel %vm314, %v364, 0.0
          %v367 = vadd.f32 %v365, %v366
          %v368 = vrot.slane %v367, 4
          %v369 = vadd.f32 %v367, %v368
          %v370 = vrot.slane %v369, 2
          %v371 = vadd.f32 %v369, %v370
          %v372 = vrot.slane %v371, 1
          %v373 = vadd.f32 %v371, %v372
          %v374 = vsel %vm314, %v373, 0.0
          %375 = vadd.xlane.f32.xlu0 %v374
          %v376 = vpop.xlane.xlu0 %375
          %v377 = vadd.f32 %v362, %v376
          %378 = vst.msk [vmem:[#allocation5] sm:$0x1] %vm328, %v377
          %v379 = vld [vmem:[#allocation6] sm:$0x1]
          %v380 = vsel %vm314, %v309, 0.0
          %v381 = vsel %vm314, %v310, 0.0
          %v382 = vadd.f32 %v380, %v381
          %v383 = vrot.slane %v382, 4
          %v384 = vadd.f32 %v382, %v383
          %v385 = vrot.slane %v384, 2
          %v386 = vadd.f32 %v384, %v385
          %v387 = vrot.slane %v386, 1
          %v388 = vadd.f32 %v386, %v387
          %v389 = vsel %vm314, %v388, 0.0
          %390 = vadd.xlane.f32.xlu0 %v389
          %v391 = vpop.xlane.xlu0 %390
          %v392 = vadd.f32 %v379, %v391
          %393 = vst.msk [vmem:[#allocation6] sm:$0x1] %vm328, %v392
        $region44: #{tpu_custom_call.1} parent=31 // pred_fallthru
          _
        %p394 = scmp.eq.s32.totalorder %s26, 1
        %p395 = pnand %p394, %p293
        %p396 = pneg %p395
        // Predicated region
        $region45: #{tpu_custom_call.1} parent=31 // pred_check
          _
        $region46: #{tpu_custom_call.1} parent=31 // pred_check_branch
          %398 = sbr.rel (%p395) target = $region48
        $region47: #{tpu_custom_call.1} parent=31 // pred_region
          %v399 = vld [vmem:[#allocation2] sm:$0x1]
          %v400 = vld [vmem:[#allocation3] sm:$0x1]
          %v401 = vld [vmem:[#allocation4] sm:$0x1]
          %v402 = vld [vmem:[#allocation5] sm:$0x1]
          %v403 = vld [vmem:[#allocation6] sm:$0x1]
          %v404 = vmul.f32 %v399, %v401
          %v405 = vmul.f32 %v400, %v400
          %v406 = vsub.f32 %v404, %v405
          %vm407 = vcmp.gt.f32.partialorder %v406, 0.0
          %v408 = vsel %vm407, %v406, 1.0
          %v409 = vmul.f32 %v401, %v402
          %v410 = vmul.f32 %v400, %v403
          %v411 = vsub.f32 %v409, %v410
          %v412 = vrcp.pop %v408
          %v413 = vmul.f32 %v411, %v412
          %v414 = vsel %vm407, %v413, 0.0
          %vm415 = vcmask 0
          %416 = vst.msk [vmem:[#allocation7] sm:$0x1] %vm415, %v414
          %v417 = vsub.f32 0.0, %v400
          %v418 = vmul.f32 %v417, %v402
          %v419 = vmul.f32 %v399, %v403
          %v420 = vadd.f32 %v418, %v419
          %v421 = vmul.f32 %v420, %v412
          %v422 = vsel %vm407, %v421, 0.0
          %423 = vst.msk [vmem:[#allocation8] sm:$0x1] %vm415, %v422
          %424 = vst.msk [vmem:[#allocation9] sm:$0x1] %vm415, 0.0
        $region48: #{tpu_custom_call.1} parent=31 // pred_fallthru
          _
        // Predicated region
        $region49: #{tpu_custom_call.1} parent=31 // pred_check
          %p425 = pneg %p394
        $region50: #{tpu_custom_call.1} parent=31 // pred_check_branch
          %427 = sbr.rel (%p425) target = $region52
        $region51: #{tpu_custom_call.1} parent=31 // pred_region
          %v428 = vld [vmem:[#allocation7] sm:$0x1]
          %v430 = vlaneseq
          %v431 = vshrl.u32 %v430, 7
          %v432 = vsub.s32 0, %v431
          %v433 = vrot.slane %v428, %v432
          %434 = vset.pattern.permute.xlu0 0
          %435 = vperm.xlu0 %434, %v433
          %v436 = vpop.permute.xlu0 %435
          %v438 = vmul.f32 %v436, %v288
          %v439 = vmul.f32 %v436, %v289
          %v440 = vld [vmem:[#allocation8] sm:$0x1]
          %v442 = vlaneseq
          %v443 = vshrl.u32 %v442, 7
          %v444 = vsub.s32 0, %v443
          %v445 = vrot.slane %v440, %v444
          %446 = vset.pattern.permute.xlu0 0
          %447 = vperm.xlu0 %446, %v445
          %v448 = vpop.permute.xlu0 %447
          %v450 = vadd.f32 %v438, %v448
          %v451 = vadd.f32 %v439, %v448
          %v452 = vsub.f32 %v450, %v290
          %v453 = vsub.f32 %v451, %v291
          %v454 = vand.u32 2147483647, %v452
          %v455 = vand.u32 2147483647, %v453
          %v456 = vld [vmem:[#allocation9] sm:$0x1]
          %v457 = vsel %vm286, %v454, 0.0
          %v458 = vsel %vm287, %v455, 0.0
          %vm459 = vcmask 130048
          %v460 = vsel %vm459, %v457, 0.0
          %v461 = vsel %vm459, %v458, 0.0
          %v462 = vadd.f32 %v460, %v461
          %v463 = vrot.slane %v462, 4
          %v464 = vadd.f32 %v462, %v463
          %v465 = vrot.slane %v464, 2
          %v466 = vadd.f32 %v464, %v465
          %v467 = vrot.slane %v466, 1
          %v468 = vadd.f32 %v466, %v467
          %v469 = vsel %vm459, %v468, 0.0
          %470 = vadd.xlane.f32.xlu0 %v469
          %v471 = vpop.xlane.xlu0 %470
          %v472 = vadd.f32 %v456, %v471
          %vm473 = vcmask 0
          %474 = vst.msk [vmem:[#allocation9] sm:$0x1] %vm473, %v472
        $region52: #{tpu_custom_call.1} parent=31 // pred_fallthru
          _
        // Predicated region
        $region53: #{tpu_custom_call.1} parent=31 // pred_check
          _
        $region54: #{tpu_custom_call.1} parent=31 // pred_check_branch
          %476 = sbr.rel (%p395) target = $region56
        $region55: #{tpu_custom_call.1} parent=31 // pred_region
          %v477 = vld [vmem:[#allocation9] sm:$0x1]
          %vm478 = vcmask 0
          %479 = vst.msk [vmem:[%s262] sm:$0x1] %vm478, %v477
          %v480 = vld [vmem:[#allocation4] sm:$0x1]
          %v482 = vlaneseq
          %v483 = vshrl.u32 %v482, 7
          %v484 = vsub.s32 0, %v483
          %v485 = vrot.slane %v480, %v484
          %486 = vrot.lane.b32.xlu0 %v485, 1
          %v487 = vpop.permute.xlu0 %486
          %vm489 = vcmask 8200
          %490 = vst.msk [vmem:[%s262] sm:$0x1] %vm489, %v487
        $region56: #{tpu_custom_call.1} parent=31 // pred_fallthru
          _
        %s491 = sand.u32 %s131, 1
        %s492 = scalar_lea.sflag [#allocation12], %s491
        %s493 = sand.u32 %s131, 1
        %s494 = scalar_lea.vmem [#allocation13], %s493
        // Predicated region
        $region57: #{tpu_custom_call.1} parent=31 // pred_check
          %p495 = pneg %p141
        $region58: #{tpu_custom_call.1} parent=31 // pred_check_branch
          %497 = sbr.rel (%p495) target = $region60
        $region59: #{tpu_custom_call.1} parent=31 // pred_region
          %s499 = ssub.s32 16, 16
          %500 = vsyncadd %s492, %s499
          %s501 = smul.addr %s25, 16
          %s502 = scalar_lea.hbm %s3, %s501
          %s504 = sshll.u32 %s494, 4
          %s505 = int_to_ptr.vmem [resolvable:$true] %s504
          %507 = dma.vmem_to_hbm [thread:$0]  %s505, 16, %s502, %s492
        $region60: #{tpu_custom_call.1} parent=31 // pred_fallthru
          _
      $region32: #{tpu_custom_call.1} parent=5 // pred_fallthru
        _
      %p508 = scmp.le.s32.totalorder 2, %s15
      // Predicated region
      $region61: #{tpu_custom_call.1} parent=5 // pred_check
        %p509 = pneg %p508
      $region62: #{tpu_custom_call.1} parent=5 // pred_check_branch
        %511 = sbr.rel (%p509) target = $region64
      $region63: #{tpu_custom_call.1} parent=5 // pred_region
        %s512 = ssub.s32 %s15, 2
        // Predicated region
        $region65: #{tpu_custom_call.1} parent=63 // pred_check
          %p513 = pneg %p147
        $region66: #{tpu_custom_call.1} parent=63 // pred_check_branch
          %515 = sbr.rel (%p513) target = $region68
        $region67: #{tpu_custom_call.1} parent=63 // pred_region
          %s516 = sand.u32 %s132, 1
          %s517 = scalar_lea.sflag [#allocation12], %s516
          %s518 = sand.u32 %s132, 1
          %s519 = scalar_lea.vmem [#allocation13], %s518
          %520 = dma.done %s517, 16
        $region68: #{tpu_custom_call.1} parent=63 // pred_fallthru
          _
      $region64: #{tpu_custom_call.1} parent=5 // pred_fallthru
        _
    $region6: #{tpu_custom_call.1} parent=1 // loop_footer
      %s19 = sadd.s32 1, %s15
    $region7: #{tpu_custom_call.1} parent=1 // loop_footer_branch
      %14 = sbr.rel target = $region3
    $region8: #{tpu_custom_call.1} parent=1 // loop_exit
      _
    %521 = vsyncpa [#allocation11], 1
    %s522 = scalar_lea.sflag [#allocation11], 1
    %523 = vsyncpa %s522, 1
    %524 = vsyncpa [#allocation12], 1
    %s525 = scalar_lea.sflag [#allocation12], 1
    %526 = vsyncpa %s525, 1

</llo_original>
